<compile_context>
chip_gen: v7x
topology: tpu7x:2x2x1
jax: 0.10.0
libtpu: 0.0.40
codegen_flags: <defaults>
</compile_context>

<pallas_src>
import functools
import math

import jax
import jax.numpy as jnp
from jax import lax
from jax.experimental import pallas as pl
from jax.experimental.pallas import tpu as pltpu

ARITY = 2            # arity of this synthetic primitive instance
LANES = 128


def _round_up(x, m):
    return (x + m - 1) // m * m


def _select_one_block_kernel(s_ref, x_ref, o_ref, *, arity):
    """feats <= 128: the whole [index, index+arity) window lives in one block.

    s_ref : SMEM scalar-prefetch ref, shape (1,) int32 = [index]
    x_ref : VMEM (tile_r, feats)
    o_ref : VMEM (tile_r, arity)
    """
    local = s_ref[0]
    width = x_ref.shape[-1]
    cols = lax.broadcasted_iota(jnp.int32, (1, width), 1)
    x = x_ref[...].astype(jnp.float32)
    pieces = []
    for i in range(arity):                      # arity is tiny & static
        sel = jnp.where(cols == local + i, x, 0.0)          # exact single-value select
        pieces.append(jnp.sum(sel, axis=-1, keepdims=True))  # exact: value + zeros
    o_ref[...] = jnp.concatenate(pieces, axis=-1).astype(o_ref.dtype)


def _select_two_block_kernel(s_ref, xa_ref, xb_ref, o_ref, *, arity):
    """feats > 128: window may straddle one 128-lane boundary.

    s_ref  : SMEM scalar-prefetch ref, shape (3,) int32 = [blk0, blk1, local]
    xa_ref : VMEM (tile_r, 128)  -- 128-lane block containing `index`
    xb_ref : VMEM (tile_r, 128)  -- the next 128-lane block (clamped in wrapper)
    o_ref  : VMEM (tile_r, arity)
    """
    local = s_ref[2]
    cols = lax.broadcasted_iota(jnp.int32, (1, LANES), 1)
    xa = xa_ref[...].astype(jnp.float32)
    xb = xb_ref[...].astype(jnp.float32)
    pieces = []
    for i in range(arity):
        # Column index + i lives in blk0 iff local + i < 128, else in blk1.
        va = jnp.sum(jnp.where(cols == local + i, xa, 0.0), axis=-1, keepdims=True)
        vb = jnp.sum(jnp.where(cols == local + i - LANES, xb, 0.0), axis=-1, keepdims=True)
        pieces.append(va + vb)                   # exactly one of va/vb is nonzero
    o_ref[...] = jnp.concatenate(pieces, axis=-1).astype(o_ref.dtype)


def _pick_row_tiling(rows, target_rows):
    """Row tile size & grid length: big tiles, grid_n even when possible (v7x)."""
    if rows <= target_rows:
        return rows, 1
    grid_n = -(-rows // target_rows)             # cdiv
    if grid_n > 1 and grid_n % 2 == 1:
        grid_n += 1                              # both v7x TCs get work
    tile_r = _round_up(-(-rows // grid_n), 8)    # sublane-aligned
    grid_n = -(-rows // tile_r)
    return tile_r, grid_n


@functools.partial(jax.jit, static_argnames=("arity", "tile_rows"))
def occamnet_primitive_forward(inputs, index, arity=ARITY, tile_rows=None):
    """Pallas equivalent of OccamNetPrimitive argument selection.

    inputs: (..., F) float array
    index : int32 scalar (runtime start feature index)
    returns: (..., arity) array == inputs[..., index:index+arity]
    (out-of-range `index` is clamped to the last valid window)
    """
    *lead, feats = inputs.shape
    rows = math.prod(lead) if lead else 1
    x2d = inputs.reshape(rows, feats)

    itemsize = jnp.dtype(inputs.dtype).itemsize
    if tile_rows is None:
        # keep per-step DMA bytes roughly constant across dtypes (~1-2 MiB/block)
        tile_rows = max(256, (2048 * 4) // max(itemsize, 1))
    tile_r, grid_n = _pick_row_tiling(rows, tile_rows)

    # Clamp instead of erroring (PyTorch would raise on an OOB index).
    idx = jnp.clip(jnp.asarray(index, jnp.int32), 0, max(feats - arity, 0))

    if feats <= LANES:
        # Fast path: the whole window is in the (single) feature block.
        scalars = jnp.reshape(idx, (1,)).astype(jnp.int32)
        kernel = functools.partial(_select_one_block_kernel, arity=arity)
        in_specs = [pl.BlockSpec((tile_r, feats), lambda r, s: (r, 0))]
        operands = (x2d,)
    else:
        n_fblocks = -(-feats // LANES)
        blk0 = idx // LANES
        blk1 = jnp.minimum(blk0 + 1, n_fblocks - 1)   # clamp only hit when unneeded
        local = idx - blk0 * LANES
        scalars = jnp.stack([blk0, blk1, local]).astype(jnp.int32)
        kernel = functools.partial(_select_two_block_kernel, arity=arity)
        in_specs = [
            pl.BlockSpec((tile_r, LANES), lambda r, s: (r, s[0])),
            pl.BlockSpec((tile_r, LANES), lambda r, s: (r, s[1])),
        ]
        operands = (x2d, x2d)

    out2d = pl.pallas_call(
        kernel,
        out_shape=jax.ShapeDtypeStruct((rows, arity), inputs.dtype),
        grid_spec=pltpu.PrefetchScalarGridSpec(
            num_scalar_prefetch=1,
            grid=(grid_n,),
            in_specs=in_specs,
            out_specs=pl.BlockSpec((tile_r, arity), lambda r, s: (r, 0)),
        ),
        compiler_params=pltpu.CompilerParams(
            dimension_semantics=("parallel",)),
    )(scalars, *operands)

    return out2d.reshape(*lead, arity)


if __name__ == "__main__":
    key = jax.random.PRNGKey(0)
    batch, seq = 2, 8

    # Case 1: small hidden -> single-block fast path (feats <= 128).
    hidden = 32
    x1 = jax.random.normal(key, (batch, seq, hidden), dtype=jnp.float32)
    i1 = 5
    o1 = jax.block_until_ready(occamnet_primitive_forward(x1, i1, arity=ARITY))
    r1 = x1[..., i1:i1 + ARITY]
    assert o1.shape == (batch, seq, ARITY), o1.shape
    assert jnp.allclose(o1, r1, atol=1e-6), "mismatch vs reference (case 1)"

    # Case 2: index straddling a 128-lane block boundary (two-block path).
    x2 = jax.random.normal(jax.random.PRNGKey(1), (batch, seq, 256), dtype=jnp.float32)
    i2 = 127
    o2 = jax.block_until_ready(occamnet_primitive_forward(x2, i2, arity=ARITY))
    r2 = x2[..., i2:i2 + ARITY]
    assert o2.shape == (batch, seq, ARITY), o2.shape
    assert jnp.allclose(o2, r2, atol=1e-6), "mismatch vs reference (case 2)"

    # Case 3: ragged shapes -- feats not a multiple of 128 AND rows not a
    # multiple of tile_r (small tile_rows forces ragged row tiles), including
    # a straddling index and the last valid window.
    x3 = jax.random.normal(jax.random.PRNGKey(2), (3, 7, 200), dtype=jnp.float32)
    for i3 in (0, 127, 150, 198):
        o3 = jax.block_until_ready(
            occamnet_primitive_forward(x3, i3, arity=ARITY, tile_rows=8))
        r3 = x3[..., i3:i3 + ARITY]
        assert o3.shape == (3, 7, ARITY), o3.shape
        assert jnp.allclose(o3, r3, atol=1e-6), f"mismatch vs reference (case 3, i={i3})"

    # Case 4: bf16 inputs (dtype-scaled tiling path).
    x4 = jax.random.normal(jax.random.PRNGKey(3), (batch, seq, 160),
                           dtype=jnp.bfloat16)
    i4 = 100
    o4 = jax.block_until_ready(occamnet_primitive_forward(x4, i4, arity=ARITY))
    r4 = x4[..., i4:i4 + ARITY]
    assert o4.dtype == jnp.bfloat16
    assert jnp.allclose(o4.astype(jnp.float32), r4.astype(jnp.float32),
                        atol=1e-6), "mismatch vs reference (case 4)"

    print("KERNEL_OK")
</pallas_src>

<mosaic_0001>
module attributes {stable_mosaic.version = 11 : i64} {
  func.func @_select_one_block_kernel(%arg0: i32, %arg1: memref<1xi32, #tpu.memory_space<smem>>, %arg2: memref<16x32xf32, #tpu.memory_space<vmem>>, %arg3: memref<16x2xf32, #tpu.memory_space<vmem>>) attributes {dimension_semantics = [#tpu.dimension_semantics<parallel>], iteration_bounds = array<i64: 1>, scalar_prefetch = 1 : i64, scratch_operands = 0 : i64, tpu.core_type = #tpu.core_type<tc>, window_params = [{transform_indices = @transform_0, window_bounds = array<i64: 16, 32>}, {transform_indices = @transform_1, window_bounds = array<i64: 16, 2>}]} {
    %c0 = arith.constant 0 : index
    %0 = memref.load %arg1[%c0] : memref<1xi32, #tpu.memory_space<smem>>
    %1 = tpu.iota {dimensions = array<i32: 1>} : vector<1x32xi32>
    %c0_0 = arith.constant 0 : index
    %c0_1 = arith.constant 0 : index
    %2 = vector.load %arg2[%c0_0, %c0_1] : memref<16x32xf32, #tpu.memory_space<vmem>>, vector<16x32xf32>
    %c0_i32 = arith.constant 0 : i32
    %3 = arith.addi %0, %c0_i32 : i32
    %4 = vector.broadcast %3 : i32 to vector<1x32xi32>
    %5 = arith.cmpi eq, %1, %4 : vector<1x32xi32>
    %cst = arith.constant 0.000000e+00 : f32
    %6 = vector.shape_cast %5 : vector<1x32xi1> to vector<1x32xi1>
    %7 = vector.broadcast %6 : vector<1x32xi1> to vector<16x32xi1>
    %8 = vector.broadcast %cst : f32 to vector<16x32xf32>
    %9 = arith.select %7, %2, %8 : vector<16x32xi1>, vector<16x32xf32>
    %cst_2 = arith.constant dense<0.000000e+00> : vector<16xf32>
    %10 = vector.multi_reduction <add>, %9, %cst_2 [1] : vector<16x32xf32> to vector<16xf32>
    %11 = vector.shape_cast %10 : vector<16xf32> to vector<16x1xf32>
    %c1_i32 = arith.constant 1 : i32
    %12 = arith.addi %0, %c1_i32 : i32
    %13 = vector.broadcast %12 : i32 to vector<1x32xi32>
    %14 = arith.cmpi eq, %1, %13 : vector<1x32xi32>
    %cst_3 = arith.constant 0.000000e+00 : f32
    %15 = vector.shape_cast %14 : vector<1x32xi1> to vector<1x32xi1>
    %16 = vector.broadcast %15 : vector<1x32xi1> to vector<16x32xi1>
    %17 = vector.broadcast %cst_3 : f32 to vector<16x32xf32>
    %18 = arith.select %16, %2, %17 : vector<16x32xi1>, vector<16x32xf32>
    %cst_4 = arith.constant dense<0.000000e+00> : vector<16xf32>
    %19 = vector.multi_reduction <add>, %18, %cst_4 [1] : vector<16x32xf32> to vector<16xf32>
    %20 = vector.shape_cast %19 : vector<16xf32> to vector<16x1xf32>
    %21 = tpu.concatenate %11, %20 in 1 : vector<16x1xf32>, vector<16x1xf32> -> vector<16x2xf32>
    %c0_5 = arith.constant 0 : index
    %c0_6 = arith.constant 0 : index
    %22 = vector.load %arg3[%c0_5, %c0_6] : memref<16x2xf32, #tpu.memory_space<vmem>>, vector<16x2xf32>
    tpu.vector_store %arg3[%c0_5, %c0_6], %21 {strides = array<i32>} : memref<16x2xf32, #tpu.memory_space<vmem>>, vector<16x2xf32>,
    return
  }
  func.func @transform_0(%arg0: i32, %arg1: memref<1xi32, #tpu.memory_space<smem>>) -> (i32, i32) {
    %c0_i32 = arith.constant 0 : i32
    %c0_i32_0 = arith.constant 0 : i32
    return %arg0, %c0_i32 : i32, i32
  }
  func.func @transform_1(%arg0: i32, %arg1: memref<1xi32, #tpu.memory_space<smem>>) -> (i32, i32) {
    %c0_i32 = arith.constant 0 : i32
    %c0_i32_0 = arith.constant 0 : i32
    return %arg0, %c0_i32 : i32, i32
  }
}

</mosaic_0001>

<llo_original>
// kernel: occamnet_primitive_forward.1
$region0: #{occamnet_primitive_forward.1}
  #allocation0 [shape = 'u32[]', space=smem, size = 0x4, offset = 0x4, fixed_abs, tag = 'smem constant byte address 0x4 - core index']
  #allocation1 [shape = 'u32[144,128]{1,0:T(1,128)}', space=vmem, size = 0x12000, scoped, tag = 'internal scratch']
  #allocation2 [shape = 's32[1]{0}', space=sflag, size = 0x4, scoped, tag = 'scoped memory for occamnet_primitive_forward.1']
  #allocation3 [shape = 's32[1]{0:T(128)S(6)}', space=smem, size = 0x200, scoped, tag = 'prefetched SMEM operand 0']
  %s0 = inlined_call_operand.<no memory space> [shape: s32[1], index: 0, kind: input, shape index: {}]
  %s1 = inlined_call_operand.vmem [shape: f32[16,32], index: 1, kind: input, shape index: {}]
  %s2 = inlined_call_operand.vmem [shape: f32[16,2], index: 2, kind: output, shape index: {}]
  %s3 = sld [smem:[#allocation0]]
  $region14: #{occamnet_primitive_forward.1} parent=0
    _
  %s5 = ssub.s32 1, %s3
  %s6 = scalar_select 0, %s5, %s3
  %7 = sst [smem:[#allocation3]] %s0
  // Predicated region
  $region2: #{occamnet_primitive_forward.1} parent=0 // pred_check
    _
  $region3: #{occamnet_primitive_forward.1} parent=0 // pred_check_branch
    %9 = sbr.rel (0) target = $region5
  $region4: #{occamnet_primitive_forward.1} parent=0 // pred_region
    _
  $region5: #{occamnet_primitive_forward.1} parent=0 // pred_fallthru
    _
  %s10 = sld [smem:[#allocation3]]
  %v11 = vlaneseq
  %v12 = vand.u32 %v11, 127
  %v13 = vld [vmem:[%s1] sm:$0xff]
  %v14 = vld [vmem:[%s1 + $0x8] sm:$0xff]
  %v15 = vstv %s10
  %vm16 = vcmp.eq.s32.totalorder %v12, %v15
  %v17 = vsel %vm16, 1, 0
  %vm18 = vcmp.eq.s32.totalorder %v17, 1
  %v19 = vsel %vm18, %v13, 0.0
  %v20 = vsel %vm18, %v14, 0.0
  %vm21 = vcmask 261120
  %v22 = vsel %vm21, %v19, 0.0
  %23 = vadd.xlane.f32.xlu0 %v22
  %v24 = vpop.xlane.xlu0 %23
  %v25 = vsel %vm21, %v20, 0.0
  %26 = vadd.xlane.f32.xlu0 %v25
  %v27 = vpop.xlane.xlu0 %26
  %s28 = sadd.s32 %s10, 1
  %v29 = vstv %s28
  %vm30 = vcmp.eq.s32.totalorder %v12, %v29
  %v31 = vsel %vm30, 1, 0
  %vm32 = vcmp.eq.s32.totalorder %v31, 1
  %v33 = vsel %vm32, %v13, 0.0
  %v34 = vsel %vm32, %v14, 0.0
  %v35 = vsel %vm21, %v33, 0.0
  %36 = vadd.xlane.f32.xlu0 %v35
  %v37 = vpop.xlane.xlu0 %36
  %v38 = vsel %vm21, %v34, 0.0
  %39 = vadd.xlane.f32.xlu0 %v38
  %v40 = vpop.xlane.xlu0 %39
  %vm41 = vcmask 7168
  %v42 = vsel %vm41, %v24, %v37
  %v43 = vsel %vm41, %v27, %v40
  %vm44 = vcmask 15360
  %45 = vst.msk [vmem:[%s2] sm:$0xff] %vm44, %v42
  %46 = vst.msk [vmem:[%s2 + $0x8] sm:$0xff] %vm44, %v43
  // Predicated region
  $region6: #{occamnet_primitive_forward.1} parent=0 // pred_check
    _
  $region7: #{occamnet_primitive_forward.1} parent=0 // pred_check_branch
    %48 = sbr.rel (0) target = $region9
  $region8: #{occamnet_primitive_forward.1} parent=0 // pred_region
    _
  $region9: #{occamnet_primitive_forward.1} parent=0 // pred_fallthru
    _
  // Predicated region
  $region10: #{occamnet_primitive_forward.1} parent=0 // pred_check
    _
  $region11: #{occamnet_primitive_forward.1} parent=0 // pred_check_branch
    %50 = sbr.rel (0) target = $region13
  $region12: #{occamnet_primitive_forward.1} parent=0 // pred_region
    _
  $region13: #{occamnet_primitive_forward.1} parent=0 // pred_fallthru
    _

</llo_original>
